<compile_context>
chip_gen: v6e
topology: v6e:2x2x1
jax: 0.10.0
libtpu: 0.0.40
codegen_flags: <defaults>
</compile_context>

<pallas_src>
import jax
import jax.numpy as jnp
from jax.experimental import pallas as pl
from jax.experimental.pallas import tpu as pltpu


# ---------------------------------------------------------------------------
# Fused Pallas kernel
# ---------------------------------------------------------------------------
def fused_basis_linear_kernel(x_ref, bqrp_ref, ckron_ref, bb_ref, bck_ref, o_ref):
    """
    x_ref    : (TB, R_in)                 current batch tile of the input state
    bqrp_ref : (R_in, rank*R_out)         basis, q-major layout
    ckron_ref: (rank*R_out, C_out*R_out)  Kronecker-expanded coefficients
    bb_ref   : (8, 8)                     padded flattened bias basis (row 0 is real)
    bck_ref  : (8, C_out*R_out)           padded Kronecker-expanded bias coefficients
    o_ref    : (TB, C_out*R_out)          output tile (lane-dense, 128 wide)

    The equivariant weight / bias reconstruction is recomputed in EVERY grid step:
    it is a tiny (36,144)x(144,128) MXU dot (~1.3 MFLOP) that hides completely under
    the per-step output DMA.  This makes each grid step fully independent, so the
    batch axis can be "parallel" (v7x megacore) with no scratch-init hazard.
    """
    # W^T[q, o*R_out+p] = sum_r coeffs[o,r] * basis[r,p,q]
    wt = jnp.dot(bqrp_ref[...], ckron_ref[...], preferred_element_type=jnp.float32)
    # bias[o*R_out+p] = sum_s bias_coeffs[o,s] * bias_basis[s,p]   (lives in row 0)
    bias = jnp.dot(bb_ref[...], bck_ref[...], preferred_element_type=jnp.float32)
    # out = x @ W^T + bias
    acc = jnp.dot(x_ref[...], wt, preferred_element_type=jnp.float32)
    o_ref[...] = (acc + bias[0:1, :]).astype(o_ref.dtype)


# ---------------------------------------------------------------------------
# Module
# ---------------------------------------------------------------------------
class SingleBasisDirectSumLayerPallas:
    """
    Pallas port of symmetrizer SingleBasisDirectSumLayer (== one BasisLinear with a
    direct-sum input representation and the traffic permutation output representation).
    """

    SINGLE_STEP_MAX_ROWS = 4096   # whole batch in one grid step up to this many rows
    LARGE_BATCH_TILE = 2048       # batch-tile rows beyond that

    def __init__(self, input_size, output_size, key,
                 vector_repr_dim=20, feature_repr_dim=16, out_repr_dim=4,
                 group_order=4, bias=True, out_dtype=jnp.float32):
        # forward does state.unsqueeze(1) => the channel dimension of the input is 1
        assert input_size == 1, "SingleBasisDirectSumLayer forward implies channels_in == 1"
        self.channels_in = input_size
        self.channels_out = output_size
        self.repr_size_in = vector_repr_dim + feature_repr_dim   # direct sum
        self.repr_size_out = out_repr_dim
        # rank of the equivariant subspace (synthetic but with the canonical size)
        self.rank = (self.repr_size_out * self.repr_size_in) // group_order
        self.bias_rank = 1
        self.has_bias = bias
        self.out_dtype = out_dtype   # set to jnp.bfloat16 to halve output HBM traffic

        k_basis, k_coef, k_bbasis, k_bcoef = jax.random.split(key, 4)

        # Canonical parameters (same shapes as the original module).
        self.basis = jax.random.normal(
            k_basis, (self.rank, self.repr_size_out, self.repr_size_in),
            dtype=jnp.float32) / jnp.sqrt(self.repr_size_in)
        gain = 1.0 / jnp.sqrt(float(self.channels_in * self.repr_size_in))
        self.coeffs = gain * jax.random.normal(
            k_coef, (self.channels_out, self.channels_in, self.rank), dtype=jnp.float32)

        self.bias_basis = jax.random.normal(
            k_bbasis, (self.bias_rank, self.repr_size_out), dtype=jnp.float32)
        self.bias_coeffs = 0.1 * jax.random.normal(
            k_bcoef, (self.channels_out, self.bias_rank), dtype=jnp.float32)

        # One-time kernel-friendly layouts of the parameters (re-run if coeffs change).
        self._prepare_kernel_layouts()

    def _prepare_kernel_layouts(self):
        R_in, R_out = self.repr_size_in, self.repr_size_out
        rank, C_out = self.rank, self.channels_out
        eye = jnp.eye(R_out, dtype=jnp.float32)

        # basis in q-major layout: [q, r*R_out + p] = basis[r, p, q]
        self.basis_qrp = jnp.transpose(self.basis, (2, 0, 1)).reshape(R_in, rank * R_out)

        # Kronecker-expanded coeffs so basis_qrp @ coeffs_kron == W^T (D_in, D_out)
        c2d = self.coeffs.reshape(C_out, rank)               # C_in == 1
        self.coeffs_kron = jnp.kron(c2d.T, eye)              # (rank*R_out, C_out*R_out)

        # Bias path with the same trick, padded to clean (8, 8)/(8, 128) tiles.
        bb = jnp.zeros((8, 8), jnp.float32)
        bck = jnp.zeros((8, C_out * R_out), jnp.float32)
        if self.has_bias:
            nb = self.bias_rank * R_out
            bb = bb.at[0, :nb].set(self.bias_basis.reshape(-1))
            bck = bck.at[:nb, :].set(jnp.kron(self.bias_coeffs.T, eye))
        self.bias_basis_pad = bb
        self.bias_coeffs_kron = bck

    # -- forward ------------------------------------------------------------
    def __call__(self, state):
        assert state.ndim == 2 and state.shape[1] == self.repr_size_in, state.shape
        B = state.shape[0]
        R_in, R_out = self.repr_size_in, self.repr_size_out
        C_out, rank = self.channels_out, self.rank
        D_out = C_out * R_out
        KR = rank * R_out

        x = state.astype(jnp.float32)

        # Only sublane-align the batch to a multiple of 8 when needed; in the common
        # (B % 8 == 0) case there is NO pad and NO post-kernel slice / extra HBM pass.
        B8 = ((B + 7) // 8) * 8
        if B8 != B:
            x = jnp.pad(x, ((0, B8 - B), (0, 0)))

        # Whole batch in a single grid step up to 4096 rows; 2048-row tiles beyond.
        # Ragged last tiles (huge, non-divisible batches) are handled by pl.cdiv:
        # out-of-range rows are never written back.
        TB = B8 if B8 <= self.SINGLE_STEP_MAX_ROWS else self.LARGE_BATCH_TILE
        n_steps = pl.cdiv(B8, TB)

        out_bytes = jnp.dtype(self.out_dtype).itemsize
        cost = pl.CostEstimate(
            flops=int(2 * B8 * R_in * D_out
                      + n_steps * (2 * R_in * KR * D_out + 2 * 8 * 8 * D_out)),
            transcendentals=0,
            bytes_accessed=int(B8 * R_in * 4 + B8 * D_out * out_bytes
                               + 4 * (R_in * KR + KR * D_out + 8 * 8 + 8 * D_out)),
        )

        out_flat = pl.pallas_call(
            fused_basis_linear_kernel,
            out_shape=jax.ShapeDtypeStruct((B8, D_out), self.out_dtype),
            grid=(n_steps,),
            in_specs=[
                pl.BlockSpec((TB, R_in), lambda i: (i, 0)),     # x batch tile
                pl.BlockSpec((R_in, KR), lambda i: (0, 0)),     # basis (q-major)
                pl.BlockSpec((KR, D_out), lambda i: (0, 0)),    # kron coeffs
                pl.BlockSpec((8, 8), lambda i: (0, 0)),         # bias basis (padded)
                pl.BlockSpec((8, D_out), lambda i: (0, 0)),     # kron bias coeffs
            ],
            out_specs=pl.BlockSpec((TB, D_out), lambda i: (i, 0)),
            # Every grid step is independent (weight rebuild is per-step), so the
            # batch axis is parallel -> v7x megacore uses both TensorCores.
            compiler_params=pltpu.CompilerParams(dimension_semantics=("parallel",)),
            cost_estimate=cost,
        )(x, self.basis_qrp, self.coeffs_kron, self.bias_basis_pad, self.bias_coeffs_kron)

        if B8 != B:
            out_flat = out_flat[:B]
        return out_flat.reshape(B, C_out, R_out)

    # -- pure-JAX reference (for correctness check) --------------------------
    def reference(self, state):
        B = state.shape[0]
        x3 = state.reshape(B, self.channels_in, self.repr_size_in).astype(jnp.float32)
        out = jnp.einsum('oir,rpq,biq->bop', self.coeffs, self.basis, x3)
        if self.has_bias:
            out = out + jnp.einsum('or,rp->op', self.bias_coeffs, self.bias_basis)[None]
        return out


# ---------------------------------------------------------------------------
if __name__ == "__main__":
    key = jax.random.PRNGKey(0)
    k_param, k_state = jax.random.split(key)

    input_size = 1        # unsqueeze(1) in the original forward implies channels_in == 1
    output_size = 32      # C_out; C_out * R_out = 128 (lane-dense output)
    batch = 16

    layer = SingleBasisDirectSumLayerPallas(input_size, output_size, k_param)

    state = jax.random.normal(k_state, (batch, layer.repr_size_in), dtype=jnp.float32)

    out = layer(state)
    out = jax.block_until_ready(out)

    ref = layer.reference(state)
    assert out.shape == (batch, output_size, layer.repr_size_out), out.shape
    assert jnp.allclose(out, ref, rtol=1e-4, atol=1e-4), float(jnp.max(jnp.abs(out - ref)))

    print("KERNEL_OK")
</pallas_src>

<mosaic_0001>
module attributes {stable_mosaic.version = 11 : i64} {
  func.func @fused_basis_linear_kernel(%arg0: i32, %arg1: memref<16x36xf32, #tpu.memory_space<vmem>>, %arg2: memref<36x144xf32, #tpu.memory_space<vmem>>, %arg3: memref<144x128xf32, #tpu.memory_space<vmem>>, %arg4: memref<8x8xf32, #tpu.memory_space<vmem>>, %arg5: memref<8x128xf32, #tpu.memory_space<vmem>>, %arg6: memref<16x128xf32, #tpu.memory_space<vmem>>) attributes {dimension_semantics = [#tpu.dimension_semantics<parallel>], iteration_bounds = array<i64: 1>, scalar_prefetch = 0 : i64, scratch_operands = 0 : i64, tpu.core_type = #tpu.core_type<tc>, window_params = [{transform_indices = @transform_0, window_bounds = array<i64: 16, 36>}, {pipeline_mode = #tpu.pipeline_mode<synchronous>, transform_indices = @transform_1, window_bounds = array<i64: 36, 144>}, {pipeline_mode = #tpu.pipeline_mode<synchronous>, transform_indices = @transform_2, window_bounds = array<i64: 144, 128>}, {pipeline_mode = #tpu.pipeline_mode<synchronous>, transform_indices = @transform_3, window_bounds = array<i64: 8, 8>}, {pipeline_mode = #tpu.pipeline_mode<synchronous>, transform_indices = @transform_4, window_bounds = array<i64: 8, 128>}, {transform_indices = @transform_5, window_bounds = array<i64: 16, 128>}]} {
    %c0 = arith.constant 0 : index
    %c0_0 = arith.constant 0 : index
    %0 = vector.load %arg2[%c0, %c0_0] : memref<36x144xf32, #tpu.memory_space<vmem>>, vector<36x144xf32>
    %c0_1 = arith.constant 0 : index
    %c0_2 = arith.constant 0 : index
    %1 = vector.load %arg3[%c0_1, %c0_2] : memref<144x128xf32, #tpu.memory_space<vmem>>, vector<144x128xf32>
    %cst = arith.constant dense<0.000000e+00> : vector<36x128xf32>
    %2 = tpu.matmul %0, %1, %cst {dimension_numbers = #tpu.dot_dimension_numbers<[1], [0], [0], [1], [0, 0, 1, 1], [], []>} : vector<36x144xf32>, vector<144x128xf32>, vector<36x128xf32> -> vector<36x128xf32>
    %c0_3 = arith.constant 0 : index
    %c0_4 = arith.constant 0 : index
    %3 = vector.load %arg4[%c0_3, %c0_4] : memref<8x8xf32, #tpu.memory_space<vmem>>, vector<8x8xf32>
    %c0_5 = arith.constant 0 : index
    %c0_6 = arith.constant 0 : index
    %4 = vector.load %arg5[%c0_5, %c0_6] : memref<8x128xf32, #tpu.memory_space<vmem>>, vector<8x128xf32>
    %cst_7 = arith.constant dense<0.000000e+00> : vector<8x128xf32>
    %5 = tpu.matmul %3, %4, %cst_7 {dimension_numbers = #tpu.dot_dimension_numbers<[1], [0], [0], [1], [0, 0, 1, 1], [], []>} : vector<8x8xf32>, vector<8x128xf32>, vector<8x128xf32> -> vector<8x128xf32>
    %c0_8 = arith.constant 0 : index
    %c0_9 = arith.constant 0 : index
    %6 = vector.load %arg1[%c0_8, %c0_9] : memref<16x36xf32, #tpu.memory_space<vmem>>, vector<16x36xf32>
    %cst_10 = arith.constant dense<0.000000e+00> : vector<16x128xf32>
    %7 = tpu.matmul %6, %2, %cst_10 {dimension_numbers = #tpu.dot_dimension_numbers<[1], [0], [0], [1], [0, 0, 1, 1], [], []>} : vector<16x36xf32>, vector<36x128xf32>, vector<16x128xf32> -> vector<16x128xf32>
    %8 = vector.extract_strided_slice %5 {offsets = [0, 0], sizes = [1, 128], strides = [1, 1]} : vector<8x128xf32> to vector<1x128xf32>
    %9 = vector.broadcast %8 : vector<1x128xf32> to vector<16x128xf32>
    %10 = arith.addf %7, %9 : vector<16x128xf32>
    %c0_11 = arith.constant 0 : index
    %c0_12 = arith.constant 0 : index
    %11 = vector.load %arg6[%c0_11, %c0_12] : memref<16x128xf32, #tpu.memory_space<vmem>>, vector<16x128xf32>
    tpu.vector_store %arg6[%c0_11, %c0_12], %10 {strides = array<i32>} : memref<16x128xf32, #tpu.memory_space<vmem>>, vector<16x128xf32>,
    return
  }
  func.func @transform_0(%arg0: i32) -> (i32, i32) {
    %c0_i32 = arith.constant 0 : i32
    %c0_i32_0 = arith.constant 0 : i32
    return %arg0, %c0_i32 : i32, i32
  }
  func.func @transform_1(%arg0: i32) -> (i32, i32) {
    %c0_i32 = arith.constant 0 : i32
    %c0_i32_0 = arith.constant 0 : i32
    %c0_i32_1 = arith.constant 0 : i32
    return %c0_i32, %c0_i32_0 : i32, i32
  }
  func.func @transform_2(%arg0: i32) -> (i32, i32) {
    %c0_i32 = arith.constant 0 : i32
    %c0_i32_0 = arith.constant 0 : i32
    %c0_i32_1 = arith.constant 0 : i32
    return %c0_i32, %c0_i32_0 : i32, i32
  }
  func.func @transform_3(%arg0: i32) -> (i32, i32) {
    %c0_i32 = arith.constant 0 : i32
    %c0_i32_0 = arith.constant 0 : i32
    %c0_i32_1 = arith.constant 0 : i32
    return %c0_i32, %c0_i32_0 : i32, i32
  }
  func.func @transform_4(%arg0: i32) -> (i32, i32) {
    %c0_i32 = arith.constant 0 : i32
    %c0_i32_0 = arith.constant 0 : i32
    %c0_i32_1 = arith.constant 0 : i32
    return %c0_i32, %c0_i32_0 : i32, i32
  }
  func.func @transform_5(%arg0: i32) -> (i32, i32) {
    %c0_i32 = arith.constant 0 : i32
    %c0_i32_0 = arith.constant 0 : i32
    return %arg0, %c0_i32 : i32, i32
  }
}

</mosaic_0001>

<llo_original>
// kernel: tpu_custom_call.1
$region0: #{tpu_custom_call.1}
  #allocation0 [shape = 'u32[]', space=smem, size = 0x4, offset = 0x4, fixed_abs, tag = 'smem constant byte address 0x4 - core index']
  #allocation1 [shape = 'u32[144,128]{1,0:T(1,128)}', space=vmem, size = 0x12000, scoped, tag = 'internal scratch']
  %s0 = inlined_call_operand.hbm [shape: f32[16,36], index: 0, kind: input, shape index: {}]
  %s1 = inlined_call_operand.hbm [shape: f32[36,144], index: 1, kind: input, shape index: {}]
  %s2 = inlined_call_operand.hbm [shape: f32[144,128], index: 2, kind: input, shape index: {}]
  %s3 = inlined_call_operand.hbm [shape: f32[8,8], index: 3, kind: input, shape index: {}]
  %s4 = inlined_call_operand.hbm [shape: f32[8,128], index: 4, kind: input, shape index: {}]
  %s5 = inlined_call_operand.hbm [shape: f32[16,128], index: 5, kind: output, shape index: {}]
  %s6 = sld [smem:[#allocation0]]
  $region50: #{tpu_custom_call.1} parent=0
    _
  %s8 = ssub.s32 1, %s6
  %s9 = scalar_select 0, %s8, %s6
  $region1: #{tpu_custom_call.1} parent=0
    #allocation2 [shape = 'u8[8192]{0}', space=vmem, size = 0x2000, scoped, tag = 'input window, operand 0, single buffered']
    #allocation3 [shape = 's32[1]{0}', space=sflag, size = 0x4, scoped, tag = 'scoped memory for tpu_custom_call.1']
    #allocation4 [shape = 's32[1]{0}', space=sflag, size = 0x4, scoped, tag = 'scoped memory for tpu_custom_call.1']
    #allocation5 [shape = 'u8[40960]{0}', space=vmem, size = 0xa000, scoped, tag = 'input window, operand 1, single buffered']
    #allocation6 [shape = 's32[1]{0}', space=sflag, size = 0x4, scoped, tag = 'scoped memory for tpu_custom_call.1']
    #allocation7 [shape = 'u8[73728]{0}', space=vmem, size = 0x12000, scoped, tag = 'input window, operand 2, single buffered']
    #allocation8 [shape = 'u8[4096]{0}', space=vmem, size = 0x1000, scoped, tag = 'input window, operand 3, single buffered']
    #allocation9 [shape = 's32[1]{0}', space=sflag, size = 0x4, scoped, tag = 'scoped memory for tpu_custom_call.1']
    #allocation10 [shape = 'u8[4096]{0}', space=vmem, size = 0x1000, scoped, tag = 'input window, operand 4, single buffered']
    #allocation11 [shape = 'u8[8192]{0}', space=vmem, size = 0x2000, scoped, tag = 'output window, operand 0, single buffered']
    %10 = vsyncpa [#allocation3], 0
    %11 = vsyncpa [#allocation6], 0
    %12 = vsyncpa [#allocation9], 0
    %13 = vsyncpa [#allocation4], 0
    // Predicated region
    $region2: #{tpu_custom_call.1} parent=1 // pred_check
      _
    $region3: #{tpu_custom_call.1} parent=1 // pred_check_branch
      %15 = sbr.rel (0) target = $region5
    $region4: #{tpu_custom_call.1} parent=1 // pred_region
      %s17 = ssub.s32 256, 256
      %18 = vsyncadd [#allocation3], %s17
      %s19 = sshll.u32 [#allocation2], 4
      %s20 = int_to_ptr.vmem [resolvable:$true] %s19
      %25 = dma.hbm_to_vmem [thread:$0]  %s0, 256, %s20, [#allocation3], 128, 128, 8
    $region5: #{tpu_custom_call.1} parent=1 // pred_fallthru
      _
    // Predicated region
    $region6: #{tpu_custom_call.1} parent=1 // pred_check
      _
    $region7: #{tpu_custom_call.1} parent=1 // pred_check_branch
      %27 = sbr.rel (0) target = $region9
    $region8: #{tpu_custom_call.1} parent=1 // pred_region
      %s29 = ssub.s32 1280, 1280
      %30 = vsyncadd [#allocation6], %s29
      %s31 = sshll.u32 [#allocation5], 4
      %s32 = int_to_ptr.vmem [resolvable:$true] %s31
      %37 = dma.hbm_to_vmem [thread:$0]  %s1, 1280, %s32, [#allocation6], 256, 256, 16
    $region9: #{tpu_custom_call.1} parent=1 // pred_fallthru
      _
    // Predicated region
    $region10: #{tpu_custom_call.1} parent=1 // pred_check
      _
    $region11: #{tpu_custom_call.1} parent=1 // pred_check_branch
      %39 = sbr.rel (0) target = $region13
    $region12: #{tpu_custom_call.1} parent=1 // pred_region
      %s41 = ssub.s32 2304, 2304
      %42 = vsyncadd [#allocation6], %s41
      %s43 = sshll.u32 [#allocation7], 4
      %s44 = int_to_ptr.vmem [resolvable:$true] %s43
      %49 = dma.hbm_to_vmem [thread:$0]  %s2, 2304, %s44, [#allocation6], 128, 128, 8
    $region13: #{tpu_custom_call.1} parent=1 // pred_fallthru
      _
    // Predicated region
    $region14: #{tpu_custom_call.1} parent=1 // pred_check
      _
    $region15: #{tpu_custom_call.1} parent=1 // pred_check_branch
      %51 = sbr.rel (0) target = $region17
    $region16: #{tpu_custom_call.1} parent=1 // pred_region
      %s53 = ssub.s32 128, 128
      %54 = vsyncadd [#allocation9], %s53
      %s56 = sshll.u32 [#allocation8], 4
      %s57 = int_to_ptr.vmem [resolvable:$true] %s56
      %59 = dma.hbm_to_vmem [thread:$0]  %s3, 128, %s57, [#allocation9]
    $region17: #{tpu_custom_call.1} parent=1 // pred_fallthru
      _
    // Predicated region
    $region18: #{tpu_custom_call.1} parent=1 // pred_check
      _
    $region19: #{tpu_custom_call.1} parent=1 // pred_check_branch
      %61 = sbr.rel (0) target = $region21
    $region20: #{tpu_custom_call.1} parent=1 // pred_region
      %s63 = ssub.s32 128, 128
      %64 = vsyncadd [#allocation9], %s63
      %s66 = sshll.u32 [#allocation10], 4
      %s67 = int_to_ptr.vmem [resolvable:$true] %s66
      %69 = dma.hbm_to_vmem [thread:$0]  %s4, 128, %s67, [#allocation9]
    $region21: #{tpu_custom_call.1} parent=1 // pred_fallthru
      _
    // Predicated region
    $region22: #{tpu_custom_call.1} parent=1 // pred_check
      _
    $region23: #{tpu_custom_call.1} parent=1 // pred_check_branch
      %71 = sbr.rel (0) target = $region25
    $region24: #{tpu_custom_call.1} parent=1 // pred_region
      %72 = dma.done [#allocation3], 256
    $region25: #{tpu_custom_call.1} parent=1 // pred_fallthru
      _
    // Predicated region
    $region26: #{tpu_custom_call.1} parent=1 // pred_check
      _
    $region27: #{tpu_custom_call.1} parent=1 // pred_check_branch
      %74 = sbr.rel (0) target = $region29
    $region28: #{tpu_custom_call.1} parent=1 // pred_region
      %75 = dma.done [#allocation6], 1280
    $region29: #{tpu_custom_call.1} parent=1 // pred_fallthru
      _
    // Predicated region
    $region30: #{tpu_custom_call.1} parent=1 // pred_check
      _
    $region31: #{tpu_custom_call.1} parent=1 // pred_check_branch
      %77 = sbr.rel (0) target = $region33
    $region32: #{tpu_custom_call.1} parent=1 // pred_region
      %78 = dma.done [#allocation6], 2304
    $region33: #{tpu_custom_call.1} parent=1 // pred_fallthru
      _
    // Predicated region
    $region34: #{tpu_custom_call.1} parent=1 // pred_check
      _
    $region35: #{tpu_custom_call.1} parent=1 // pred_check_branch
      %80 = sbr.rel (0) target = $region37
    $region36: #{tpu_custom_call.1} parent=1 // pred_region
      %81 = dma.done [#allocation9], 128
    $region37: #{tpu_custom_call.1} parent=1 // pred_fallthru
      _
    // Predicated region
    $region38: #{tpu_custom_call.1} parent=1 // pred_check
      _
    $region39: #{tpu_custom_call.1} parent=1 // pred_check_branch
      %83 = sbr.rel (0) target = $region41
    $region40: #{tpu_custom_call.1} parent=1 // pred_region
      %84 = dma.done [#allocation9], 128
    $region41: #{tpu_custom_call.1} parent=1 // pred_fallthru
      _
    %v85 = vld [vmem:[#allocation5] sm:$0xff]
    %v86 = vld [vmem:[#allocation5 + $0x8] sm:$0xff]
    %v87 = vld [vmem:[#allocation5 + $0x10] sm:$0xff]
    %v88 = vld [vmem:[#allocation5 + $0x18] sm:$0xff]
    %v89 = vld [vmem:[#allocation5 + $0x20] sm:$0xff]
    %v90 = vld [vmem:[#allocation5 + $0x28] sm:$0xff]
    %v91 = vld [vmem:[#allocation5 + $0x30] sm:$0xff]
    %v92 = vld [vmem:[#allocation5 + $0x38] sm:$0xff]
    %v93 = vld [vmem:[#allocation5 + $0x40] sm:$0xf]
    %v94 = vld [vmem:[#allocation5 + $0x48] sm:$0xf]
    %v95 = vld [vmem:[#allocation7] sm:$0xff]
    %v96 = vld [vmem:[#allocation7 + $0x8] sm:$0xff]
    %v97 = vld [vmem:[#allocation7 + $0x10] sm:$0xff]
    %v98 = vld [vmem:[#allocation7 + $0x18] sm:$0xff]
    %v99 = vld [vmem:[#allocation7 + $0x20] sm:$0xff]
    %v100 = vld [vmem:[#allocation7 + $0x28] sm:$0xff]
    %v101 = vld [vmem:[#allocation7 + $0x30] sm:$0xff]
    %v102 = vld [vmem:[#allocation7 + $0x38] sm:$0xff]
    %v103 = vld [vmem:[#allocation7 + $0x40] sm:$0xff]
    %v104 = vld [vmem:[#allocation7 + $0x48] sm:$0xff]
    %v105 = vld [vmem:[#allocation7 + $0x50] sm:$0xff]
    %v106 = vld [vmem:[#allocation7 + $0x58] sm:$0xff]
    %v107 = vld [vmem:[#allocation7 + $0x60] sm:$0xff]
    %v108 = vld [vmem:[#allocation7 + $0x68] sm:$0xff]
    %v109 = vld [vmem:[#allocation7 + $0x70] sm:$0xff]
    %v110 = vld [vmem:[#allocation7 + $0x78] sm:$0xff]
    %v111 = vld [vmem:[#allocation7 + $0x80] sm:$0xff]
    %v112 = vld [vmem:[#allocation7 + $0x88] sm:$0xff]
    %vm113 = vcmask 130048
    %v115 = vsel %vm113, %v86, 0
    %v118 = vsel %vm113, %v88, 0
    %v121 = vsel %vm113, %v90, 0
    %v124 = vsel %vm113, %v92, 0
    %v127 = vsel %vm113, %v94, 0
    %129 = vmatprep.subr.mxu0 0.0
    %130 = vmatpush1.msra.mxu0 %v110
    %131 = vmatprep.subr.mxu0 0.0
    %132 = vmatpush1.msra.mxu0 %v109
    %133 = vmatprep.subr.mxu0 0.0
    %134 = vmatpush1.msra.mxu0 %v108
    %135 = vmatprep.subr.mxu0 0.0
    %136 = vmatpush1.msra.mxu0 %v107
    %137 = vmatprep.subr.mxu0 0.0
    %138 = vmatpush1.msra.mxu0 %v106
    %139 = vmatprep.subr.mxu0 0.0
    %140 = vmatpush1.msra.mxu0 %v105
    %141 = vmatprep.subr.mxu0 0.0
    %142 = vmatpush1.msra.mxu0 %v104
    %143 = vmatprep.subr.mxu0 0.0
    %144 = vmatpush1.msra.mxu0 %v103
    %145 = vmatprep.subr.mxu0 0.0
    %146 = vmatpush1.msra.mxu0 %v102
    %147 = vmatprep.subr.mxu0 0.0
    %148 = vmatpush1.msra.mxu0 %v101
    %149 = vmatprep.subr.mxu0 0.0
    %150 = vmatpush1.msra.mxu0 %v100
    %151 = vmatprep.subr.mxu0 0.0
    %152 = vmatpush1.msra.mxu0 %v99
    %153 = vmatprep.subr.mxu0 0.0
    %154 = vmatpush1.msra.mxu0 %v98
    %155 = vmatprep.subr.mxu0 0.0
    %156 = vmatpush1.msra.mxu0 %v97
    %157 = vmatprep.subr.mxu0 0.0
    %158 = vmatpush1.msra.mxu0 %v96
    %159 = vmatprep.subr.mxu0 0.0
    %160 = vmatpush1.msra.mxu0 %v95
    %161 = vmatprep.subr.mxu0 0.0
    %162 = vmatpush2.msra.mxu0 0.0
    %163 = vmatprep.subr.mxu0 0.0
    %164 = vmatpush2.msra.mxu0 0.0
    %165 = vmatprep.subr.mxu0 0.0
    %166 = vmatpush2.msra.mxu0 0.0
    %167 = vmatprep.subr.mxu0 0.0
    %168 = vmatpush2.msra.mxu0 0.0
    %169 = vmatprep.subr.mxu0 0.0
    %170 = vmatpush2.msra.mxu0 0.0
    %171 = vmatprep.subr.mxu0 0.0
    %172 = vmatpush2.msra.mxu0 0.0
    %173 = vmatprep.subr.mxu0 0.0
    %174 = vmatpush2.msra.mxu0 0.0
    %175 = vmatprep.subr.mxu0 0.0
    %176 = vmatpush2.msra.mxu0 0.0
    %177 = vmatprep.subr.mxu0 0.0
    %178 = vmatpush2.msra.mxu0 0.0
    %179 = vmatprep.subr.mxu0 0.0
    %180 = vmatpush2.msra.mxu0 0.0
    %181 = vmatprep.subr.mxu0 0.0
    %182 = vmatpush2.msra.mxu0 0.0
    %183 = vmatprep.subr.mxu0 0.0
    %184 = vmatpush2.msra.mxu0 0.0
    %185 = vmatprep.subr.mxu0 0.0
    %186 = vmatpush2.msra.mxu0 0.0
    %187 = vmatprep.subr.mxu0 0.0
    %188 = vmatpush2.msra.mxu0 0.0
    %189 = vmatprep.subr.mxu0 0.0
    %190 = vmatpush2.msra.mxu0 %v112
    %191 = vmatprep.subr.mxu0 0.0
    %192 = vmatpush2.msra.mxu0 %v111
    %193 = vmatprep.mubr.f32.mxu0 %v115
    %194 = vmatmul.mubr.f32.gmra.mxu0 %v85
    %v195 = vpop.f32.mrf.mxu0
    %v196 = vadd.f32 0.0, %v195
    %v197 = vpop.f32.mrf.mxu0
    %198 = vmatprep.mubr.f32.mxu0 %v118
    %199 = vmatmul.mubr.f32.gmra.mxu0 %v87
    %v200 = vpop.f32.mrf.mxu0
    %v201 = vadd.f32 0.0, %v200
    %v202 = vpop.f32.mrf.mxu0
    %203 = vmatprep.mubr.f32.mxu0 %v121
    %204 = vmatmul.mubr.f32.gmra.mxu0 %v89
    %v205 = vpop.f32.mrf.mxu0
    %v206 = vadd.f32 0.0, %v205
    %v207 = vpop.f32.mrf.mxu0
    %208 = vmatprep.mubr.f32.mxu0 %v124
    %209 = vmatmul.mubr.f32.gmra.mxu0 %v91
    %v210 = vpop.f32.mrf.mxu0
    %v211 = vadd.f32 0.0, %v210
    %v212 = vpop.f32.mrf.mxu0
    %213 = vmatprep.mubr.f32.mxu0 %v127
    %214 = vmatmul.mubr.f32.gmra.mxu0 %v93
    %v215 = vpop.f32.mrf.mxu0
    %v216 = vadd.f32 0.0, %v215
    %v217 = vpop.f32.mrf.mxu0
    %218 = vdwg.mxu0
    %v219 = vld [vmem:[#allocation8] sm:$0xff]
    %v220 = vld [vmem:[#allocation10] sm:$0xff]
    %vm221 = vcmask 64512
    %v223 = vsel %vm221, %v219, 0
    %225 = vmatprep.subr.mxu0 0.0
    %226 = vmatpush1.msra.mxu0 0.0
    %227 = vmatprep.subr.mxu0 0.0
    %228 = vmatpush1.msra.mxu0 0.0
    %229 = vmatprep.subr.mxu0 0.0
    %230 = vmatpush1.msra.mxu0 0.0
    %231 = vmatprep.subr.mxu0 0.0
    %232 = vmatpush1.msra.mxu0 0.0
    %233 = vmatprep.subr.mxu0 0.0
    %234 = vmatpush1.msra.mxu0 0.0
    %235 = vmatprep.subr.mxu0 0.0
    %236 = vmatpush1.msra.mxu0 0.0
    %237 = vmatprep.subr.mxu0 0.0
    %238 = vmatpush1.msra.mxu0 0.0
    %239 = vmatprep.subr.mxu0 0.0
    %240 = vmatpush1.msra.mxu0 0.0
    %241 = vmatprep.subr.mxu0 0.0
    %242 = vmatpush1.msra.mxu0 0.0
    %243 = vmatprep.subr.mxu0 0.0
    %244 = vmatpush1.msra.mxu0 0.0
    %245 = vmatprep.subr.mxu0 0.0
    %246 = vmatpush1.msra.mxu0 0.0
    %247 = vmatprep.subr.mxu0 0.0
    %248 = vmatpush1.msra.mxu0 0.0
    %249 = vmatprep.subr.mxu0 0.0
    %250 = vmatpush1.msra.mxu0 0.0
    %251 = vmatprep.subr.mxu0 0.0
    %252 = vmatpush1.msra.mxu0 0.0
    %253 = vmatprep.subr.mxu0 0.0
    %254 = vmatpush1.msra.mxu0 0.0
    %255 = vmatprep.subr.mxu0 0.0
    %256 = vmatpush1.msra.mxu0 %v220
    %257 = vmatprep.subr.mxu0 0.0
    %258 = vmatpush2.msra.mxu0 0.0
    %259 = vmatprep.subr.mxu0 0.0
    %260 = vmatpush2.msra.mxu0 0.0
    %261 = vmatprep.subr.mxu0 0.0
    %262 = vmatpush2.msra.mxu0 0.0
    %263 = vmatprep.subr.mxu0 0.0
    %264 = vmatpush2.msra.mxu0 0.0
    %265 = vmatprep.subr.mxu0 0.0
    %266 = vmatpush2.msra.mxu0 0.0
    %267 = vmatprep.subr.mxu0 0.0
    %268 = vmatpush2.msra.mxu0 0.0
    %269 = vmatprep.subr.mxu0 0.0
    %270 = vmatpush2.msra.mxu0 0.0
    %271 = vmatprep.subr.mxu0 0.0
    %272 = vmatpush2.msra.mxu0 0.0
    %273 = vmatprep.subr.mxu0 0.0
    %274 = vmatpush2.msra.mxu0 0.0
    %275 = vmatprep.subr.mxu0 0.0
    %276 = vmatpush2.msra.mxu0 0.0
    %277 = vmatprep.subr.mxu0 0.0
    %278 = vmatpush2.msra.mxu0 0.0
    %279 = vmatprep.subr.mxu0 0.0
    %280 = vmatpush2.msra.mxu0 0.0
    %281 = vmatprep.subr.mxu0 0.0
    %282 = vmatpush2.msra.mxu0 0.0
    %283 = vmatprep.subr.mxu0 0.0
    %284 = vmatpush2.msra.mxu0 0.0
    %285 = vmatprep.subr.mxu0 0.0
    %286 = vmatpush2.msra.mxu0 0.0
    %287 = vmatprep.subr.mxu0 0.0
    %288 = vmatpush2.msra.mxu0 0.0
    %289 = vmatprep.mubr.f32.mxu0 0.0
    %290 = vmatmul.mubr.f32.gmra.mxu0 %v223
    %v291 = vpop.f32.mrf.mxu0
    %v292 = vadd.f32 0.0, %v291
    %v293 = vpop.f32.mrf.mxu0
    %294 = vdwg.mxu0
    %v295 = vld [vmem:[#allocation2] sm:$0xff]
    %v296 = vld [vmem:[#allocation2 + $0x8] sm:$0xff]
    %v297 = vlaneseq
    %v298 = vshrl.u32 %v297, 7
    %v299 = vsub.s32 0, %v298
    %v300 = vrot.slane %v292, %v299
    %vm301 = vcmask 293888
    %v303 = vsel %vm301, %v295, 0
    %v306 = vsel %vm301, %v296, 0
    %vm308 = vcmask 1043456
    %v310 = vsel %vm308, %v216, 0
    %312 = vmatprep.subr.mxu0 0.0
    %313 = vmatpush1.msra.mxu0 0.0
    %314 = vmatprep.subr.mxu0 0.0
    %315 = vmatpush1.msra.mxu0 0.0
    %316 = vmatprep.subr.mxu0 0.0
    %317 = vmatpush1.msra.mxu0 0.0
    %318 = vmatprep.subr.mxu0 0.0
    %319 = vmatpush1.msra.mxu0 0.0
    %320 = vmatprep.subr.mxu0 0.0
    %321 = vmatpush1.msra.mxu0 0.0
    %322 = vmatprep.subr.mxu0 0.0
    %323 = vmatpush1.msra.mxu0 0.0
    %324 = vmatprep.subr.mxu0 0.0
    %325 = vmatpush1.msra.mxu0 0.0
    %326 = vmatprep.subr.mxu0 0.0
    %327 = vmatpush1.msra.mxu0 0.0
    %328 = vmatprep.subr.mxu0 0.0
    %329 = vmatpush1.msra.mxu0 0.0
    %330 = vmatprep.subr.mxu0 0.0
    %331 = vmatpush1.msra.mxu0 0.0
    %332 = vmatprep.subr.mxu0 0.0
    %333 = vmatpush1.msra.mxu0 0.0
    %334 = vmatprep.subr.mxu0 0.0
    %335 = vmatpush1.msra.mxu0 %v310
    %336 = vmatprep.subr.mxu0 0.0
    %337 = vmatpush1.msra.mxu0 %v211
    %338 = vmatprep.subr.mxu0 0.0
    %339 = vmatpush1.msra.mxu0 %v206
    %340 = vmatprep.subr.mxu0 0.0
    %341 = vmatpush1.msra.mxu0 %v201
    %342 = vmatprep.subr.mxu0 0.0
    %343 = vmatpush1.msra.mxu0 %v196
    %344 = vmatprep.subr.mxu0 0.0
    %345 = vmatpush2.msra.mxu0 0.0
    %346 = vmatprep.subr.mxu0 0.0
    %347 = vmatpush2.msra.mxu0 0.0
    %348 = vmatprep.subr.mxu0 0.0
    %349 = vmatpush2.msra.mxu0 0.0
    %350 = vmatprep.subr.mxu0 0.0
    %351 = vmatpush2.msra.mxu0 0.0
    %352 = vmatprep.subr.mxu0 0.0
    %353 = vmatpush2.msra.mxu0 0.0
    %354 = vmatprep.subr.mxu0 0.0
    %355 = vmatpush2.msra.mxu0 0.0
    %356 = vmatprep.subr.mxu0 0.0
    %357 = vmatpush2.msra.mxu0 0.0
    %358 = vmatprep.subr.mxu0 0.0
    %359 = vmatpush2.msra.mxu0 0.0
    %360 = vmatprep.subr.mxu0 0.0
    %361 = vmatpush2.msra.mxu0 0.0
    %362 = vmatprep.subr.mxu0 0.0
    %363 = vmatpush2.msra.mxu0 0.0
    %364 = vmatprep.subr.mxu0 0.0
    %365 = vmatpush2.msra.mxu0 0.0
    %366 = vmatprep.subr.mxu0 0.0
    %367 = vmatpush2.msra.mxu0 0.0
    %368 = vmatprep.subr.mxu0 0.0
    %369 = vmatpush2.msra.mxu0 0.0
    %370 = vmatprep.subr.mxu0 0.0
    %371 = vmatpush2.msra.mxu0 0.0
    %372 = vmatprep.subr.mxu0 0.0
    %373 = vmatpush2.msra.mxu0 0.0
    %374 = vmatprep.subr.mxu0 0.0
    %375 = vmatpush2.msra.mxu0 0.0
    %376 = vmatprep.mubr.f32.mxu0 0.0
    %377 = vmatmul.mubr.f32.gmra.mxu0 %v303
    %v378 = vpop.f32.mrf.mxu0
    %v379 = vadd.f32 %v300, %v378
    %v380 = vpop.f32.mrf.mxu0
    %381 = vmatprep.mubr.f32.mxu0 0.0
    %382 = vmatmul.mubr.f32.gmra.mxu0 %v306
    %v383 = vpop.f32.mrf.mxu0
    %v384 = vadd.f32 %v300, %v383
    %v385 = vpop.f32.mrf.mxu0
    %386 = vdwg.mxu0
    %387 = vst [vmem:[#allocation11] sm:$0xff] %v379
    %388 = vst [vmem:[#allocation11 + $0x8] sm:$0xff] %v384
    // Predicated region
    $region42: #{tpu_custom_call.1} parent=1 // pred_check
      _
    $region43: #{tpu_custom_call.1} parent=1 // pred_check_branch
      %390 = sbr.rel (0) target = $region45
    $region44: #{tpu_custom_call.1} parent=1 // pred_region
      %s392 = ssub.s32 256, 256
      %393 = vsyncadd [#allocation4], %s392
      %s394 = sshll.u32 [#allocation11], 4
      %s395 = int_to_ptr.vmem [resolvable:$true] %s394
      %400 = dma.vmem_to_hbm [thread:$0]  %s395, 256, %s5, [#allocation4], 128, 128, 8
    $region45: #{tpu_custom_call.1} parent=1 // pred_fallthru
      _
    // Predicated region
    $region46: #{tpu_custom_call.1} parent=1 // pred_check
      _
    $region47: #{tpu_custom_call.1} parent=1 // pred_check_branch
      %402 = sbr.rel (0) target = $region49
    $region48: #{tpu_custom_call.1} parent=1 // pred_region
      %403 = dma.done [#allocation4], 256
    $region49: #{tpu_custom_call.1} parent=1 // pred_fallthru
      _
    %404 = vsyncpa [#allocation3], 1
    %405 = vsyncpa [#allocation6], 1
    %406 = vsyncpa [#allocation9], 1
    %407 = vsyncpa [#allocation4], 1

</llo_original>
